<compile_context>
chip_gen: v7x
topology: tpu7x:2x2x1
jax: 0.10.0
libtpu: 0.0.40
codegen_flags: <defaults>
</compile_context>

<pallas_src>
import functools
import math

import jax
import jax.numpy as jnp
from jax.experimental import pallas as pl
from jax.experimental.pallas import tpu as pltpu


_LANE = 128
_SUBLANE = 8
_VMEM_LIMIT = 48 * 1024 * 1024  # leave headroom under v7x's 64 MiB physical VMEM


def _round_up(x, m):
    return ((x + m - 1) // m) * m


def _pad_axis(x, axis, target):
    if x.shape[axis] == target:
        return x
    pads = [(0, 0)] * x.ndim
    pads[axis] = (0, target - x.shape[axis])
    return jnp.pad(x, pads)


# ---------------------------------------------------------------------------
# Kernel 1: fused q/k/v linear projections over (B*S) rows.
# ---------------------------------------------------------------------------
def _proj_kernel(xq_ref, xk_ref, xv_ref,
                 wq_ref, bq_ref, wk_ref, bk_ref, wv_ref, bv_ref,
                 q_ref, k_ref, v_ref):
    # One grid step = one (tile_m, Ep) slab of the flattened batch*seq rows.
    # q/k/v consume different input tensors so they cannot be a single matmul,
    # but all three MXU dots happen per step with f32 accumulation.
    def proj(x_ref, w_ref, b_ref, o_ref):
        acc = jnp.dot(x_ref[...], w_ref[...],
                      preferred_element_type=jnp.float32)
        o_ref[...] = (acc + b_ref[...]).astype(o_ref.dtype)   # bias add in f32

    proj(xq_ref, wq_ref, bq_ref, q_ref)
    proj(xk_ref, wk_ref, bk_ref, k_ref)
    proj(xv_ref, wv_ref, bv_ref, v_ref)


# ---------------------------------------------------------------------------
# Kernel 2: flash-style scaled dot-product attention (online softmax).
# ---------------------------------------------------------------------------
def _flash_attn_kernel(q_ref, k_ref, v_ref, o_ref, m_sc, l_sc, acc_sc,
                       *, scale, seq_len, s_pad, block_k):
    ki = pl.program_id(2)

    @pl.when(ki == 0)
    def _():
        m_sc[...] = jnp.full(m_sc.shape, -jnp.inf, jnp.float32)
        l_sc[...] = jnp.zeros(l_sc.shape, jnp.float32)
        acc_sc[...] = jnp.zeros(acc_sc.shape, jnp.float32)

    q = q_ref[0]                         # (blk_q, Hp), compute dtype
    k = k_ref[0]                         # (blk_k, Hp)

    # scores = q @ k^T contracted on the last axes directly (no k.T copy).
    s = jax.lax.dot_general(
        q, k, dimension_numbers=(((1,), (1,)), ((), ())),
        preferred_element_type=jnp.float32) * scale           # (blk_q, blk_k)

    if s_pad != seq_len:
        # Mask padded key positions (zero-padded seq rows project to the bias).
        key_idx = ki * block_k + jax.lax.broadcasted_iota(jnp.int32, s.shape, 1)
        s = jnp.where(key_idx < seq_len, s, -jnp.inf)

    m_prev = m_sc[...]
    m_new = jnp.maximum(m_prev, jnp.max(s, axis=-1, keepdims=True))
    alpha = jnp.exp(m_prev - m_new)
    p = jnp.exp(s - m_new)
    l_sc[...] = alpha * l_sc[...] + jnp.sum(p, axis=-1, keepdims=True)
    acc_sc[...] = alpha * acc_sc[...] + jnp.dot(
        p.astype(v_ref.dtype), v_ref[0], preferred_element_type=jnp.float32)
    m_sc[...] = m_new

    @pl.when(ki == pl.num_programs(2) - 1)
    def _():
        # approx reciprocal lowers to the otherwise-idle EUP slot.
        o_ref[0] = (acc_sc[...] * pl.reciprocal(l_sc[...], approx=True)
                    ).astype(o_ref.dtype)

    # TODO(synk): optional query_mask/key_mask/mask path (masked_fill with -inf)
    # is not wired in; the module's default forward (mask=None) is implemented.


# ---------------------------------------------------------------------------
# Wrapper
# ---------------------------------------------------------------------------
def attention_head(query, key, value, wq, bq, wk, bk, wv, bv,
                   *, compute_dtype=jnp.bfloat16):
    """query/key/value: (B, S, E); w*: (E, H); b*: (H,). Returns (B, S, H)."""
    B, S, E = query.shape
    H = wq.shape[1]
    out_dtype = query.dtype

    # Lane-dense padding: last dims up to multiples of the 128-lane vreg width.
    Ep = _round_up(E, _LANE)
    Hp = _round_up(H, _LANE)

    # Sequence tiling (query / key tiles).
    blk_q = _LANE if S >= _LANE else _round_up(S, _SUBLANE)
    blk_k = blk_q
    S_pad = _round_up(S, blk_q)

    # ---- 1) projections: fold batch+seq into one M dimension ---------------
    def prep_x(x):
        x = _pad_axis(_pad_axis(x, 2, Ep), 1, S_pad)          # (B, S_pad, Ep)
        return x.reshape(B * S_pad, Ep).astype(compute_dtype)

    xq, xk, xv = prep_x(query), prep_x(key), prep_x(value)
    M = B * S_pad
    tile_m = min(512, M)
    Mp = _round_up(M, tile_m)
    xq, xk, xv = (_pad_axis(t, 0, Mp) for t in (xq, xk, xv))

    def prep_w(w):
        return _pad_axis(_pad_axis(w, 0, Ep), 1, Hp).astype(compute_dtype)

    def prep_b(b):
        return _pad_axis(b, 0, Hp).reshape(1, Hp).astype(jnp.float32)

    wq_p, wk_p, wv_p = prep_w(wq), prep_w(wk), prep_w(wv)
    bq_p, bk_p, bv_p = prep_b(bq), prep_b(bk), prep_b(bv)

    x_spec = pl.BlockSpec((tile_m, Ep), lambda i: (i, 0))
    # TODO(synk): weights/biases have constant index_maps (no re-DMA) but are
    # still double-buffered; single-buffer them to reclaim VMEM on v7x.
    w_spec = pl.BlockSpec((Ep, Hp), lambda i: (0, 0))
    b_spec = pl.BlockSpec((1, Hp), lambda i: (0, 0))
    qkv_spec = pl.BlockSpec((tile_m, Hp), lambda i: (i, 0))

    q_p, k_p, v_p = pl.pallas_call(
        _proj_kernel,
        out_shape=tuple(jax.ShapeDtypeStruct((Mp, Hp), compute_dtype)
                        for _ in range(3)),
        grid_spec=pltpu.PrefetchScalarGridSpec(
            num_scalar_prefetch=0,
            grid=(Mp // tile_m,),
            in_specs=[x_spec, x_spec, x_spec,
                      w_spec, b_spec, w_spec, b_spec, w_spec, b_spec],
            out_specs=(qkv_spec, qkv_spec, qkv_spec),
        ),
        compiler_params=pltpu.CompilerParams(
            dimension_semantics=("parallel",),
            vmem_limit_bytes=_VMEM_LIMIT),
    )(xq, xk, xv, wq_p, bq_p, wk_p, bk_p, wv_p, bv_p)

    q_p = q_p[:M].reshape(B, S_pad, Hp)
    k_p = k_p[:M].reshape(B, S_pad, Hp)
    v_p = v_p[:M].reshape(B, S_pad, Hp)

    # ---- 2) flash-style attention ------------------------------------------
    scale = 1.0 / math.sqrt(float(H))        # dim_k = head_dim (pre-padding)
    kernel = functools.partial(_flash_attn_kernel, scale=scale,
                               seq_len=S, s_pad=S_pad, block_k=blk_k)

    q_spec = pl.BlockSpec((1, blk_q, Hp), lambda b, qi, ki: (b, qi, 0))
    kv_spec = pl.BlockSpec((1, blk_k, Hp), lambda b, qi, ki: (b, ki, 0))
    o_spec = pl.BlockSpec((1, blk_q, Hp), lambda b, qi, ki: (b, qi, 0))

    out = pl.pallas_call(
        kernel,
        out_shape=jax.ShapeDtypeStruct((B, S_pad, Hp), out_dtype),
        grid_spec=pltpu.PrefetchScalarGridSpec(
            num_scalar_prefetch=0,
            grid=(B, S_pad // blk_q, S_pad // blk_k),
            in_specs=[q_spec, kv_spec, kv_spec],
            out_specs=o_spec,
            scratch_shapes=[pltpu.VMEM((blk_q, 1), jnp.float32),   # m
                            pltpu.VMEM((blk_q, 1), jnp.float32),   # l
                            pltpu.VMEM((blk_q, Hp), jnp.float32)], # acc
        ),
        compiler_params=pltpu.CompilerParams(
            dimension_semantics=("parallel", "parallel", "arbitrary"),
            vmem_limit_bytes=_VMEM_LIMIT),
    )(q_p, k_p, v_p)

    return out[:, :S, :H]


# ---------------------------------------------------------------------------
# Reference + self-test
# ---------------------------------------------------------------------------
def _reference(query, key, value, wq, bq, wk, bk, wv, bv):
    q = query @ wq + bq
    k = key @ wk + bk
    v = value @ wv + bv
    scores = jnp.einsum("bqd,bkd->bqk", q, k) / math.sqrt(q.shape[-1])
    weights = jax.nn.softmax(scores, axis=-1)
    return jnp.einsum("bqk,bkd->bqd", weights, v)


if __name__ == "__main__":
    B, S, E, H = 2, 8, 32, 16

    key0 = jax.random.PRNGKey(0)
    ks = jax.random.split(key0, 9)

    # Deterministic parameter init (uniform, PyTorch-Linear-like scale 1/sqrt(E)).
    lim = 1.0 / math.sqrt(E)
    wq = jax.random.uniform(ks[0], (E, H), jnp.float32, -lim, lim)
    bq = jax.random.uniform(ks[1], (H,), jnp.float32, -lim, lim)
    wk = jax.random.uniform(ks[2], (E, H), jnp.float32, -lim, lim)
    bk = jax.random.uniform(ks[3], (H,), jnp.float32, -lim, lim)
    wv = jax.random.uniform(ks[4], (E, H), jnp.float32, -lim, lim)
    bv = jax.random.uniform(ks[5], (H,), jnp.float32, -lim, lim)

    query = jax.random.normal(ks[6], (B, S, E), jnp.float32)
    key_in = jax.random.normal(ks[7], (B, S, E), jnp.float32)
    value = jax.random.normal(ks[8], (B, S, E), jnp.float32)

    ref = _reference(query, key_in, value, wq, bq, wk, bk, wv, bv)

    # f32 compute path: tight check against the f32 reference.
    out_f32 = attention_head(query, key_in, value, wq, bq, wk, bk, wv, bv,
                             compute_dtype=jnp.float32)
    out_f32 = jax.block_until_ready(out_f32)
    assert out_f32.shape == (B, S, H)
    assert jnp.allclose(out_f32, ref, atol=2e-3, rtol=2e-3), "f32 mismatch"

    # Default bf16-MXU path (f32 accumulation / softmax): looser tolerance.
    out_bf16 = attention_head(query, key_in, value, wq, bq, wk, bk, wv, bv)
    out_bf16 = jax.block_until_ready(out_bf16)
    assert out_bf16.shape == (B, S, H)
    assert jnp.allclose(out_bf16, ref, atol=5e-2, rtol=5e-2), "bf16 mismatch"

    print("KERNEL_OK")
</pallas_src>

<mosaic_0001>
module attributes {stable_mosaic.version = 11 : i64} {
  func.func @_proj_kernel(%arg0: i32, %arg1: memref<16x128xf32, #tpu.memory_space<vmem>>, %arg2: memref<16x128xf32, #tpu.memory_space<vmem>>, %arg3: memref<16x128xf32, #tpu.memory_space<vmem>>, %arg4: memref<128x128xf32, #tpu.memory_space<vmem>>, %arg5: memref<1x128xf32, #tpu.memory_space<vmem>>, %arg6: memref<128x128xf32, #tpu.memory_space<vmem>>, %arg7: memref<1x128xf32, #tpu.memory_space<vmem>>, %arg8: memref<128x128xf32, #tpu.memory_space<vmem>>, %arg9: memref<1x128xf32, #tpu.memory_space<vmem>>, %arg10: memref<16x128xf32, #tpu.memory_space<vmem>>, %arg11: memref<16x128xf32, #tpu.memory_space<vmem>>, %arg12: memref<16x128xf32, #tpu.memory_space<vmem>>) attributes {dimension_semantics = [#tpu.dimension_semantics<parallel>], iteration_bounds = array<i64: 1>, scalar_prefetch = 0 : i64, scratch_operands = 0 : i64, tpu.core_type = #tpu.core_type<tc>, window_params = [{transform_indices = @transform_0, window_bounds = array<i64: 16, 128>}, {transform_indices = @transform_1, window_bounds = array<i64: 16, 128>}, {transform_indices = @transform_2, window_bounds = array<i64: 16, 128>}, {pipeline_mode = #tpu.pipeline_mode<synchronous>, transform_indices = @transform_3, window_bounds = array<i64: 128, 128>}, {pipeline_mode = #tpu.pipeline_mode<synchronous>, transform_indices = @transform_4, window_bounds = array<i64: 1, 128>}, {pipeline_mode = #tpu.pipeline_mode<synchronous>, transform_indices = @transform_5, window_bounds = array<i64: 128, 128>}, {pipeline_mode = #tpu.pipeline_mode<synchronous>, transform_indices = @transform_6, window_bounds = array<i64: 1, 128>}, {pipeline_mode = #tpu.pipeline_mode<synchronous>, transform_indices = @transform_7, window_bounds = array<i64: 128, 128>}, {pipeline_mode = #tpu.pipeline_mode<synchronous>, transform_indices = @transform_8, window_bounds = array<i64: 1, 128>}, {transform_indices = @transform_9, window_bounds = array<i64: 16, 128>}, {transform_indices = @transform_10, window_bounds = array<i64: 16, 128>}, {transform_indices = @transform_11, window_bounds = array<i64: 16, 128>}]} {
    %c0 = arith.constant 0 : index
    %c0_0 = arith.constant 0 : index
    %0 = vector.load %arg1[%c0, %c0_0] : memref<16x128xf32, #tpu.memory_space<vmem>>, vector<16x128xf32>
    %c0_1 = arith.constant 0 : index
    %c0_2 = arith.constant 0 : index
    %1 = vector.load %arg4[%c0_1, %c0_2] : memref<128x128xf32, #tpu.memory_space<vmem>>, vector<128x128xf32>
    %cst = arith.constant dense<0.000000e+00> : vector<16x128xf32>
    %2 = tpu.matmul %0, %1, %cst {dimension_numbers = #tpu.dot_dimension_numbers<[1], [0], [0], [1], [0, 0, 1, 1], [], []>} : vector<16x128xf32>, vector<128x128xf32>, vector<16x128xf32> -> vector<16x128xf32>
    %c0_3 = arith.constant 0 : index
    %c0_4 = arith.constant 0 : index
    %3 = vector.load %arg5[%c0_3, %c0_4] : memref<1x128xf32, #tpu.memory_space<vmem>>, vector<1x128xf32>
    %4 = vector.broadcast %3 : vector<1x128xf32> to vector<16x128xf32>
    %5 = arith.addf %2, %4 : vector<16x128xf32>
    %c0_5 = arith.constant 0 : index
    %c0_6 = arith.constant 0 : index
    %6 = vector.load %arg10[%c0_5, %c0_6] : memref<16x128xf32, #tpu.memory_space<vmem>>, vector<16x128xf32>
    tpu.vector_store %arg10[%c0_5, %c0_6], %5 {strides = array<i32>} : memref<16x128xf32, #tpu.memory_space<vmem>>, vector<16x128xf32>,
    %c0_7 = arith.constant 0 : index
    %c0_8 = arith.constant 0 : index
    %7 = vector.load %arg2[%c0_7, %c0_8] : memref<16x128xf32, #tpu.memory_space<vmem>>, vector<16x128xf32>
    %c0_9 = arith.constant 0 : index
    %c0_10 = arith.constant 0 : index
    %8 = vector.load %arg6[%c0_9, %c0_10] : memref<128x128xf32, #tpu.memory_space<vmem>>, vector<128x128xf32>
    %cst_11 = arith.constant dense<0.000000e+00> : vector<16x128xf32>
    %9 = tpu.matmul %7, %8, %cst_11 {dimension_numbers = #tpu.dot_dimension_numbers<[1], [0], [0], [1], [0, 0, 1, 1], [], []>} : vector<16x128xf32>, vector<128x128xf32>, vector<16x128xf32> -> vector<16x128xf32>
    %c0_12 = arith.constant 0 : index
    %c0_13 = arith.constant 0 : index
    %10 = vector.load %arg7[%c0_12, %c0_13] : memref<1x128xf32, #tpu.memory_space<vmem>>, vector<1x128xf32>
    %11 = vector.broadcast %10 : vector<1x128xf32> to vector<16x128xf32>
    %12 = arith.addf %9, %11 : vector<16x128xf32>
    %c0_14 = arith.constant 0 : index
    %c0_15 = arith.constant 0 : index
    %13 = vector.load %arg11[%c0_14, %c0_15] : memref<16x128xf32, #tpu.memory_space<vmem>>, vector<16x128xf32>
    tpu.vector_store %arg11[%c0_14, %c0_15], %12 {strides = array<i32>} : memref<16x128xf32, #tpu.memory_space<vmem>>, vector<16x128xf32>,
    %c0_16 = arith.constant 0 : index
    %c0_17 = arith.constant 0 : index
    %14 = vector.load %arg3[%c0_16, %c0_17] : memref<16x128xf32, #tpu.memory_space<vmem>>, vector<16x128xf32>
    %c0_18 = arith.constant 0 : index
    %c0_19 = arith.constant 0 : index
    %15 = vector.load %arg8[%c0_18, %c0_19] : memref<128x128xf32, #tpu.memory_space<vmem>>, vector<128x128xf32>
    %cst_20 = arith.constant dense<0.000000e+00> : vector<16x128xf32>
    %16 = tpu.matmul %14, %15, %cst_20 {dimension_numbers = #tpu.dot_dimension_numbers<[1], [0], [0], [1], [0, 0, 1, 1], [], []>} : vector<16x128xf32>, vector<128x128xf32>, vector<16x128xf32> -> vector<16x128xf32>
    %c0_21 = arith.constant 0 : index
    %c0_22 = arith.constant 0 : index
    %17 = vector.load %arg9[%c0_21, %c0_22] : memref<1x128xf32, #tpu.memory_space<vmem>>, vector<1x128xf32>
    %18 = vector.broadcast %17 : vector<1x128xf32> to vector<16x128xf32>
    %19 = arith.addf %16, %18 : vector<16x128xf32>
    %c0_23 = arith.constant 0 : index
    %c0_24 = arith.constant 0 : index
    %20 = vector.load %arg12[%c0_23, %c0_24] : memref<16x128xf32, #tpu.memory_space<vmem>>, vector<16x128xf32>
    tpu.vector_store %arg12[%c0_23, %c0_24], %19 {strides = array<i32>} : memref<16x128xf32, #tpu.memory_space<vmem>>, vector<16x128xf32>,
    return
  }
  func.func @transform_0(%arg0: i32) -> (i32, i32) {
    %c0_i32 = arith.constant 0 : i32
    %c0_i32_0 = arith.constant 0 : i32
    return %arg0, %c0_i32 : i32, i32
  }
  func.func @transform_1(%arg0: i32) -> (i32, i32) {
    %c0_i32 = arith.constant 0 : i32
    %c0_i32_0 = arith.constant 0 : i32
    return %arg0, %c0_i32 : i32, i32
  }
  func.func @transform_2(%arg0: i32) -> (i32, i32) {
    %c0_i32 = arith.constant 0 : i32
    %c0_i32_0 = arith.constant 0 : i32
    return %arg0, %c0_i32 : i32, i32
  }
  func.func @transform_3(%arg0: i32) -> (i32, i32) {
    %c0_i32 = arith.constant 0 : i32
    %c0_i32_0 = arith.constant 0 : i32
    %c0_i32_1 = arith.constant 0 : i32
    return %c0_i32, %c0_i32_0 : i32, i32
  }
  func.func @transform_4(%arg0: i32) -> (i32, i32) {
    %c0_i32 = arith.constant 0 : i32
    %c0_i32_0 = arith.constant 0 : i32
    %c0_i32_1 = arith.constant 0 : i32
    return %c0_i32, %c0_i32_0 : i32, i32
  }
  func.func @transform_5(%arg0: i32) -> (i32, i32) {
    %c0_i32 = arith.constant 0 : i32
    %c0_i32_0 = arith.constant 0 : i32
    %c0_i32_1 = arith.constant 0 : i32
    return %c0_i32, %c0_i32_0 : i32, i32
  }
  func.func @transform_6(%arg0: i32) -> (i32, i32) {
    %c0_i32 = arith.constant 0 : i32
    %c0_i32_0 = arith.constant 0 : i32
    %c0_i32_1 = arith.constant 0 : i32
    return %c0_i32, %c0_i32_0 : i32, i32
  }
  func.func @transform_7(%arg0: i32) -> (i32, i32) {
    %c0_i32 = arith.constant 0 : i32
    %c0_i32_0 = arith.constant 0 : i32
    %c0_i32_1 = arith.constant 0 : i32
    return %c0_i32, %c0_i32_0 : i32, i32
  }
  func.func @transform_8(%arg0: i32) -> (i32, i32) {
    %c0_i32 = arith.constant 0 : i32
    %c0_i32_0 = arith.constant 0 : i32
    %c0_i32_1 = arith.constant 0 : i32
    return %c0_i32, %c0_i32_0 : i32, i32
  }
  func.func @transform_9(%arg0: i32) -> (i32, i32) {
    %c0_i32 = arith.constant 0 : i32
    %c0_i32_0 = arith.constant 0 : i32
    return %arg0, %c0_i32 : i32, i32
  }
  func.func @transform_10(%arg0: i32) -> (i32, i32) {
    %c0_i32 = arith.constant 0 : i32
    %c0_i32_0 = arith.constant 0 : i32
    return %arg0, %c0_i32 : i32, i32
  }
  func.func @transform_11(%arg0: i32) -> (i32, i32) {
    %c0_i32 = arith.constant 0 : i32
    %c0_i32_0 = arith.constant 0 : i32
    return %arg0, %c0_i32 : i32, i32
  }
}

</mosaic_0001>

<llo_original>
// kernel: tpu_custom_call.1
$region0: #{tpu_custom_call.1}
  #allocation0 [shape = 'u32[]', space=smem, size = 0x4, offset = 0x4, fixed_abs, tag = 'smem constant byte address 0x4 - core index']
  #allocation1 [shape = 'u32[144,128]{1,0:T(1,128)}', space=vmem, size = 0x12000, scoped, tag = 'internal scratch']
  %s0 = inlined_call_operand.hbm [shape: f32[16,128], index: 0, kind: input, shape index: {}]
  %s1 = inlined_call_operand.hbm [shape: f32[16,128], index: 1, kind: input, shape index: {}]
  %s2 = inlined_call_operand.hbm [shape: f32[16,128], index: 2, kind: input, shape index: {}]
  %s3 = inlined_call_operand.hbm [shape: f32[128,128], index: 3, kind: input, shape index: {}]
  %s4 = inlined_call_operand.vmem [shape: f32[1,128], index: 4, kind: input, shape index: {}]
  %s5 = inlined_call_operand.hbm [shape: f32[128,128], index: 5, kind: input, shape index: {}]
  %s6 = inlined_call_operand.vmem [shape: f32[1,128], index: 6, kind: input, shape index: {}]
  %s7 = inlined_call_operand.hbm [shape: f32[128,128], index: 7, kind: input, shape index: {}]
  %s8 = inlined_call_operand.vmem [shape: f32[1,128], index: 8, kind: input, shape index: {}]
  %s9 = inlined_call_operand.hbm [shape: f32[16,128], index: 9, kind: output, shape index: {0}]
  %s10 = inlined_call_operand.hbm [shape: f32[16,128], index: 10, kind: output, shape index: {1}]
  %s11 = inlined_call_operand.hbm [shape: f32[16,128], index: 11, kind: output, shape index: {2}]
  %12 = xla_tuple %s9, %s10, %s11
  %s13 = sld [smem:[#allocation0]]
  $region86: #{tpu_custom_call.1} parent=0
    _
  %s15 = ssub.s32 1, %s13
  %s16 = scalar_select 0, %s15, %s13
  $region1: #{tpu_custom_call.1} parent=0
    #allocation2 [shape = 'u8[8192]{0}', space=vmem, size = 0x2000, scoped, tag = 'input window, operand 0, single buffered']
    #allocation3 [shape = 's32[1]{0}', space=sflag, size = 0x4, scoped, tag = 'scoped memory for tpu_custom_call.1']
    #allocation4 [shape = 's32[1]{0}', space=sflag, size = 0x4, scoped, tag = 'scoped memory for tpu_custom_call.1']
    #allocation5 [shape = 'u8[8192]{0}', space=vmem, size = 0x2000, scoped, tag = 'input window, operand 1, single buffered']
    #allocation6 [shape = 's32[1]{0}', space=sflag, size = 0x4, scoped, tag = 'scoped memory for tpu_custom_call.1']
    #allocation7 [shape = 'u8[8192]{0}', space=vmem, size = 0x2000, scoped, tag = 'input window, operand 2, single buffered']
    #allocation8 [shape = 'u8[65536]{0}', space=vmem, size = 0x10000, scoped, tag = 'input window, operand 3, single buffered']
    #allocation9 [shape = 's32[1]{0}', space=sflag, size = 0x4, scoped, tag = 'scoped memory for tpu_custom_call.1']
    #allocation10 [shape = 'u8[65536]{0}', space=vmem, size = 0x10000, scoped, tag = 'input window, operand 5, single buffered']
    #allocation11 [shape = 'u8[65536]{0}', space=vmem, size = 0x10000, scoped, tag = 'input window, operand 7, single buffered']
    #allocation12 [shape = 's32[1]{0}', space=sflag, size = 0x4, scoped, tag = 'scoped memory for tpu_custom_call.1']
    #allocation13 [shape = 'u8[8192]{0}', space=vmem, size = 0x2000, scoped, tag = 'output window, operand 0, single buffered']
    #allocation14 [shape = 'u8[8192]{0}', space=vmem, size = 0x2000, scoped, tag = 'output window, operand 1, single buffered']
    #allocation15 [shape = 's32[1]{0}', space=sflag, size = 0x4, scoped, tag = 'scoped memory for tpu_custom_call.1']
    #allocation16 [shape = 'u8[8192]{0}', space=vmem, size = 0x2000, scoped, tag = 'output window, operand 2, single buffered']
    %17 = vsyncpa [#allocation3], 0
    %18 = vsyncpa [#allocation6], 0
    %19 = vsyncpa [#allocation9], 0
    %20 = vsyncpa [#allocation12], 0
    %21 = vsyncpa [#allocation4], 0
    %22 = vsyncpa [#allocation15], 0
    // Predicated region
    $region2: #{tpu_custom_call.1} parent=1 // pred_check
      _
    $region3: #{tpu_custom_call.1} parent=1 // pred_check_branch
      %24 = sbr.rel (0) target = $region5
    $region4: #{tpu_custom_call.1} parent=1 // pred_region
      %s26 = ssub.s32 256, 256
      %27 = vsyncadd [#allocation3], %s26
      %s28 = sshll.u32 [#allocation2], 4
      %s29 = int_to_ptr.vmem [resolvable:$true] %s28
      %34 = dma.hbm_to_vmem [thread:$0]  %s0, 256, %s29, [#allocation3], 128, 128, 8
    $region5: #{tpu_custom_call.1} parent=1 // pred_fallthru
      _
    // Predicated region
    $region6: #{tpu_custom_call.1} parent=1 // pred_check
      _
    $region7: #{tpu_custom_call.1} parent=1 // pred_check_branch
      %36 = sbr.rel (0) target = $region9
    $region8: #{tpu_custom_call.1} parent=1 // pred_region
      %s38 = ssub.s32 256, 256
      %39 = vsyncadd [#allocation6], %s38
      %s40 = sshll.u32 [#allocation5], 4
      %s41 = int_to_ptr.vmem [resolvable:$true] %s40
      %46 = dma.hbm_to_vmem [thread:$0]  %s1, 256, %s41, [#allocation6], 128, 128, 8
    $region9: #{tpu_custom_call.1} parent=1 // pred_fallthru
      _
    // Predicated region
    $region10: #{tpu_custom_call.1} parent=1 // pred_check
      _
    $region11: #{tpu_custom_call.1} parent=1 // pred_check_branch
      %48 = sbr.rel (0) target = $region13
    $region12: #{tpu_custom_call.1} parent=1 // pred_region
      %s50 = ssub.s32 256, 256
      %51 = vsyncadd [#allocation6], %s50
      %s52 = sshll.u32 [#allocation7], 4
      %s53 = int_to_ptr.vmem [resolvable:$true] %s52
      %58 = dma.hbm_to_vmem [thread:$0]  %s2, 256, %s53, [#allocation6], 128, 128, 8
    $region13: #{tpu_custom_call.1} parent=1 // pred_fallthru
      _
    // Predicated region
    $region14: #{tpu_custom_call.1} parent=1 // pred_check
      _
    $region15: #{tpu_custom_call.1} parent=1 // pred_check_branch
      %60 = sbr.rel (0) target = $region17
    $region16: #{tpu_custom_call.1} parent=1 // pred_region
      %s62 = ssub.s32 2048, 2048
      %63 = vsyncadd [#allocation9], %s62
      %s64 = sshll.u32 [#allocation8], 4
      %s65 = int_to_ptr.vmem [resolvable:$true] %s64
      %70 = dma.hbm_to_vmem [thread:$0]  %s3, 2048, %s65, [#allocation9], 128, 128, 8
    $region17: #{tpu_custom_call.1} parent=1 // pred_fallthru
      _
    // Predicated region
    $region18: #{tpu_custom_call.1} parent=1 // pred_check
      _
    $region19: #{tpu_custom_call.1} parent=1 // pred_check_branch
      %72 = sbr.rel (0) target = $region21
    $region20: #{tpu_custom_call.1} parent=1 // pred_region
      _
    $region21: #{tpu_custom_call.1} parent=1 // pred_fallthru
      _
    // Predicated region
    $region22: #{tpu_custom_call.1} parent=1 // pred_check
      _
    $region23: #{tpu_custom_call.1} parent=1 // pred_check_branch
      %74 = sbr.rel (0) target = $region25
    $region24: #{tpu_custom_call.1} parent=1 // pred_region
      %s76 = ssub.s32 2048, 2048
      %77 = vsyncadd [#allocation9], %s76
      %s78 = sshll.u32 [#allocation10], 4
      %s79 = int_to_ptr.vmem [resolvable:$true] %s78
      %84 = dma.hbm_to_vmem [thread:$0]  %s5, 2048, %s79, [#allocation9], 128, 128, 8
    $region25: #{tpu_custom_call.1} parent=1 // pred_fallthru
      _
    // Predicated region
    $region26: #{tpu_custom_call.1} parent=1 // pred_check
      _
    $region27: #{tpu_custom_call.1} parent=1 // pred_check_branch
      %86 = sbr.rel (0) target = $region29
    $region28: #{tpu_custom_call.1} parent=1 // pred_region
      _
    $region29: #{tpu_custom_call.1} parent=1 // pred_fallthru
      _
    // Predicated region
    $region30: #{tpu_custom_call.1} parent=1 // pred_check
      _
    $region31: #{tpu_custom_call.1} parent=1 // pred_check_branch
      %88 = sbr.rel (0) target = $region33
    $region32: #{tpu_custom_call.1} parent=1 // pred_region
      %s90 = ssub.s32 2048, 2048
      %91 = vsyncadd [#allocation12], %s90
      %s92 = sshll.u32 [#allocation11], 4
      %s93 = int_to_ptr.vmem [resolvable:$true] %s92
      %98 = dma.hbm_to_vmem [thread:$0]  %s7, 2048, %s93, [#allocation12], 128, 128, 8
    $region33: #{tpu_custom_call.1} parent=1 // pred_fallthru
      _
    // Predicated region
    $region34: #{tpu_custom_call.1} parent=1 // pred_check
      _
    $region35: #{tpu_custom_call.1} parent=1 // pred_check_branch
      %100 = sbr.rel (0) target = $region37
    $region36: #{tpu_custom_call.1} parent=1 // pred_region
      _
    $region37: #{tpu_custom_call.1} parent=1 // pred_fallthru
      _
    // Predicated region
    $region38: #{tpu_custom_call.1} parent=1 // pred_check
      _
    $region39: #{tpu_custom_call.1} parent=1 // pred_check_branch
      %102 = sbr.rel (0) target = $region41
    $region40: #{tpu_custom_call.1} parent=1 // pred_region
      %103 = dma.done [#allocation3], 256
    $region41: #{tpu_custom_call.1} parent=1 // pred_fallthru
      _
    // Predicated region
    $region42: #{tpu_custom_call.1} parent=1 // pred_check
      _
    $region43: #{tpu_custom_call.1} parent=1 // pred_check_branch
      %105 = sbr.rel (0) target = $region45
    $region44: #{tpu_custom_call.1} parent=1 // pred_region
      %106 = dma.done [#allocation6], 256
    $region45: #{tpu_custom_call.1} parent=1 // pred_fallthru
      _
    // Predicated region
    $region46: #{tpu_custom_call.1} parent=1 // pred_check
      _
    $region47: #{tpu_custom_call.1} parent=1 // pred_check_branch
      %108 = sbr.rel (0) target = $region49
    $region48: #{tpu_custom_call.1} parent=1 // pred_region
      %109 = dma.done [#allocation6], 256
    $region49: #{tpu_custom_call.1} parent=1 // pred_fallthru
      _
    // Predicated region
    $region50: #{tpu_custom_call.1} parent=1 // pred_check
      _
    $region51: #{tpu_custom_call.1} parent=1 // pred_check_branch
      %111 = sbr.rel (0) target = $region53
    $region52: #{tpu_custom_call.1} parent=1 // pred_region
      %112 = dma.done [#allocation9], 2048
    $region53: #{tpu_custom_call.1} parent=1 // pred_fallthru
      _
    // Predicated region
    $region54: #{tpu_custom_call.1} parent=1 // pred_check
      _
    $region55: #{tpu_custom_call.1} parent=1 // pred_check_branch
      %114 = sbr.rel (0) target = $region57
    $region56: #{tpu_custom_call.1} parent=1 // pred_region
      %115 = dma.done [#allocation9], 2048
    $region57: #{tpu_custom_call.1} parent=1 // pred_fallthru
      _
    // Predicated region
    $region58: #{tpu_custom_call.1} parent=1 // pred_check
      _
    $region59: #{tpu_custom_call.1} parent=1 // pred_check_branch
      %117 = sbr.rel (0) target = $region61
    $region60: #{tpu_custom_call.1} parent=1 // pred_region
      %118 = dma.done [#allocation12], 2048
    $region61: #{tpu_custom_call.1} parent=1 // pred_fallthru
      _
    %v119 = vld [vmem:[#allocation2] sm:$0xff]
    %v120 = vld [vmem:[#allocation2 + $0x8] sm:$0xff]
    %v121 = vld [vmem:[#allocation8] sm:$0xff]
    %v122 = vld [vmem:[#allocation8 + $0x8] sm:$0xff]
    %v123 = vld [vmem:[#allocation8 + $0x10] sm:$0xff]
    %v124 = vld [vmem:[#allocation8 + $0x18] sm:$0xff]
    %v125 = vld [vmem:[#allocation8 + $0x20] sm:$0xff]
    %v126 = vld [vmem:[#allocation8 + $0x28] sm:$0xff]
    %v127 = vld [vmem:[#allocation8 + $0x30] sm:$0xff]
    %v128 = vld [vmem:[#allocation8 + $0x38] sm:$0xff]
    %v129 = vld [vmem:[#allocation8 + $0x40] sm:$0xff]
    %v130 = vld [vmem:[#allocation8 + $0x48] sm:$0xff]
    %v131 = vld [vmem:[#allocation8 + $0x50] sm:$0xff]
    %v132 = vld [vmem:[#allocation8 + $0x58] sm:$0xff]
    %v133 = vld [vmem:[#allocation8 + $0x60] sm:$0xff]
    %v134 = vld [vmem:[#allocation8 + $0x68] sm:$0xff]
    %v135 = vld [vmem:[#allocation8 + $0x70] sm:$0xff]
    %v136 = vld [vmem:[#allocation8 + $0x78] sm:$0xff]
    %v137 = vld [vmem:[%s4] sm:$0x1]
    %v139 = vlaneseq
    %v140 = vshrl.u32 %v139, 7
    %v141 = vsub.s32 0, %v140
    %v142 = vrot.slane %v137, %v141
    %144 = vmatprep.subr.mxu0 0.0
    %145 = vmatpush1.msra.mxu0 %v121
    %146 = vmatprep.subr.mxu0 0.0
    %147 = vmatpush1.msra.mxu0 %v122
    %148 = vmatprep.subr.mxu0 0.0
    %149 = vmatpush1.msra.mxu0 %v123
    %150 = vmatprep.subr.mxu0 0.0
    %151 = vmatpush1.msra.mxu0 %v124
    %152 = vmatprep.subr.mxu0 0.0
    %153 = vmatpush1.msra.mxu0 %v125
    %154 = vmatprep.subr.mxu0 0.0
    %155 = vmatpush1.msra.mxu0 %v126
    %156 = vmatprep.subr.mxu0 0.0
    %157 = vmatpush1.msra.mxu0 %v127
    %158 = vmatprep.subr.mxu0 0.0
    %159 = vmatpush1.msra.mxu0 %v128
    %160 = vmatprep.subr.mxu0 0.0
    %161 = vmatpush1.msra.mxu0 %v129
    %162 = vmatprep.subr.mxu0 0.0
    %163 = vmatpush1.msra.mxu0 %v130
    %164 = vmatprep.subr.mxu0 0.0
    %165 = vmatpush1.msra.mxu0 %v131
    %166 = vmatprep.subr.mxu0 0.0
    %167 = vmatpush1.msra.mxu0 %v132
    %168 = vmatprep.subr.mxu0 0.0
    %169 = vmatpush1.msra.mxu0 %v133
    %170 = vmatprep.subr.mxu0 0.0
    %171 = vmatpush1.msra.mxu0 %v134
    %172 = vmatprep.subr.mxu0 0.0
    %173 = vmatpush1.msra.mxu0 %v135
    %174 = vmatprep.subr.mxu0 0.0
    %175 = vmatpush1.msra.mxu0 %v136
    %176 = vmatprep.subr.mxu0 0.0
    %177 = vmatpush1.msra.mxu0 0.0
    %178 = vmatprep.subr.mxu0 0.0
    %179 = vmatpush1.msra.mxu0 0.0
    %180 = vmatprep.subr.mxu0 0.0
    %181 = vmatpush1.msra.mxu0 0.0
    %182 = vmatprep.subr.mxu0 0.0
    %183 = vmatpush1.msra.mxu0 0.0
    %184 = vmatprep.subr.mxu0 0.0
    %185 = vmatpush1.msra.mxu0 0.0
    %186 = vmatprep.subr.mxu0 0.0
    %187 = vmatpush1.msra.mxu0 0.0
    %188 = vmatprep.subr.mxu0 0.0
    %189 = vmatpush1.msra.mxu0 0.0
    %190 = vmatprep.subr.mxu0 0.0
    %191 = vmatpush1.msra.mxu0 0.0
    %192 = vmatprep.subr.mxu0 0.0
    %193 = vmatpush1.msra.mxu0 0.0
    %194 = vmatprep.subr.mxu0 0.0
    %195 = vmatpush1.msra.mxu0 0.0
    %196 = vmatprep.subr.mxu0 0.0
    %197 = vmatpush1.msra.mxu0 0.0
    %198 = vmatprep.subr.mxu0 0.0
    %199 = vmatpush1.msra.mxu0 0.0
    %200 = vmatprep.subr.mxu0 0.0
    %201 = vmatpush1.msra.mxu0 0.0
    %202 = vmatprep.subr.mxu0 0.0
    %203 = vmatpush1.msra.mxu0 0.0
    %204 = vmatprep.subr.mxu0 0.0
    %205 = vmatpush1.msra.mxu0 0.0
    %206 = vmatprep.subr.mxu0 0.0
    %207 = vmatpush1.msra.mxu0 0.0
    %208 = vmatprep.mubr.f32.mxu0 0.0
    %209 = vmatmul.mubr.f32.gmra.mrb[0].mxu0 %v119
    %v210 = vpop.f32.mrb[0].mxu0
    %v211 = vadd.f32 %v142, %v210
    %v212 = vpop.f32.mrb[0].mxu0
    %213 = vmatprep.mubr.f32.mxu0 0.0
    %214 = vmatmul.mubr.f32.gmra.mrb[0].mxu0 %v120
    %v215 = vpop.f32.mrb[0].mxu0
    %v216 = vadd.f32 %v142, %v215
    %v217 = vpop.f32.mrb[0].mxu0
    %218 = vdwg.mxu0
    %219 = vst [vmem:[#allocation13] sm:$0xff] %v211
    %220 = vst [vmem:[#allocation13 + $0x8] sm:$0xff] %v216
    %v221 = vld [vmem:[#allocation5] sm:$0xff]
    %v222 = vld [vmem:[#allocation5 + $0x8] sm:$0xff]
    %v223 = vld [vmem:[#allocation10] sm:$0xff]
    %v224 = vld [vmem:[#allocation10 + $0x8] sm:$0xff]
    %v225 = vld [vmem:[#allocation10 + $0x10] sm:$0xff]
    %v226 = vld [vmem:[#allocation10 + $0x18] sm:$0xff]
    %v227 = vld [vmem:[#allocation10 + $0x20] sm:$0xff]
    %v228 = vld [vmem:[#allocation10 + $0x28] sm:$0xff]
    %v229 = vld [vmem:[#allocation10 + $0x30] sm:$0xff]
    %v230 = vld [vmem:[#allocation10 + $0x38] sm:$0xff]
    %v231 = vld [vmem:[#allocation10 + $0x40] sm:$0xff]
    %v232 = vld [vmem:[#allocation10 + $0x48] sm:$0xff]
    %v233 = vld [vmem:[#allocation10 + $0x50] sm:$0xff]
    %v234 = vld [vmem:[#allocation10 + $0x58] sm:$0xff]
    %v235 = vld [vmem:[#allocation10 + $0x60] sm:$0xff]
    %v236 = vld [vmem:[#allocation10 + $0x68] sm:$0xff]
    %v237 = vld [vmem:[#allocation10 + $0x70] sm:$0xff]
    %v238 = vld [vmem:[#allocation10 + $0x78] sm:$0xff]
    %v239 = vld [vmem:[%s6] sm:$0x1]
    %v241 = vlaneseq
    %v242 = vshrl.u32 %v241, 7
    %v243 = vsub.s32 0, %v242
    %v244 = vrot.slane %v239, %v243
    %246 = vmatprep.subr.mxu0 0.0
    %247 = vmatpush1.msra.mxu0 %v223
    %248 = vmatprep.subr.mxu0 0.0
    %249 = vmatpush1.msra.mxu0 %v224
    %250 = vmatprep.subr.mxu0 0.0
    %251 = vmatpush1.msra.mxu0 %v225
    %252 = vmatprep.subr.mxu0 0.0
    %253 = vmatpush1.msra.mxu0 %v226
    %254 = vmatprep.subr.mxu0 0.0
    %255 = vmatpush1.msra.mxu0 %v227
    %256 = vmatprep.subr.mxu0 0.0
    %257 = vmatpush1.msra.mxu0 %v228
    %258 = vmatprep.subr.mxu0 0.0
    %259 = vmatpush1.msra.mxu0 %v229
    %260 = vmatprep.subr.mxu0 0.0
    %261 = vmatpush1.msra.mxu0 %v230
    %262 = vmatprep.subr.mxu0 0.0
    %263 = vmatpush1.msra.mxu0 %v231
    %264 = vmatprep.subr.mxu0 0.0
    %265 = vmatpush1.msra.mxu0 %v232
    %266 = vmatprep.subr.mxu0 0.0
    %267 = vmatpush1.msra.mxu0 %v233
    %268 = vmatprep.subr.mxu0 0.0
    %269 = vmatpush1.msra.mxu0 %v234
    %270 = vmatprep.subr.mxu0 0.0
    %271 = vmatpush1.msra.mxu0 %v235
    %272 = vmatprep.subr.mxu0 0.0
    %273 = vmatpush1.msra.mxu0 %v236
    %274 = vmatprep.subr.mxu0 0.0
    %275 = vmatpush1.msra.mxu0 %v237
    %276 = vmatprep.subr.mxu0 0.0
    %277 = vmatpush1.msra.mxu0 %v238
    %278 = vmatprep.subr.mxu0 0.0
    %279 = vmatpush1.msra.mxu0 0.0
    %280 = vmatprep.subr.mxu0 0.0
    %281 = vmatpush1.msra.mxu0 0.0
    %282 = vmatprep.subr.mxu0 0.0
    %283 = vmatpush1.msra.mxu0 0.0
    %284 = vmatprep.subr.mxu0 0.0
    %285 = vmatpush1.msra.mxu0 0.0
    %286 = vmatprep.subr.mxu0 0.0
    %287 = vmatpush1.msra.mxu0 0.0
    %288 = vmatprep.subr.mxu0 0.0
    %289 = vmatpush1.msra.mxu0 0.0
    %290 = vmatprep.subr.mxu0 0.0
    %291 = vmatpush1.msra.mxu0 0.0
    %292 = vmatprep.subr.mxu0 0.0
    %293 = vmatpush1.msra.mxu0 0.0
    %294 = vmatprep.subr.mxu0 0.0
    %295 = vmatpush1.msra.mxu0 0.0
    %296 = vmatprep.subr.mxu0 0.0
    %297 = vmatpush1.msra.mxu0 0.0
    %298 = vmatprep.subr.mxu0 0.0
    %299 = vmatpush1.msra.mxu0 0.0
    %300 = vmatprep.subr.mxu0 0.0
    %301 = vmatpush1.msra.mxu0 0.0
    %302 = vmatprep.subr.mxu0 0.0
    %303 = vmatpush1.msra.mxu0 0.0
    %304 = vmatprep.subr.mxu0 0.0
    %305 = vmatpush1.msra.mxu0 0.0
    %306 = vmatprep.subr.mxu0 0.0
    %307 = vmatpush1.msra.mxu0 0.0
    %308 = vmatprep.subr.mxu0 0.0
    %309 = vmatpush1.msra.mxu0 0.0
    %310 = vmatprep.mubr.f32.mxu0 0.0
    %311 = vmatmul.mubr.f32.gmra.mrb[0].mxu0 %v221
    %v312 = vpop.f32.mrb[0].mxu0
    %v313 = vadd.f32 %v244, %v312
    %v314 = vpop.f32.mrb[0].mxu0
    %315 = vmatprep.mubr.f32.mxu0 0.0
    %316 = vmatmul.mubr.f32.gmra.mrb[0].mxu0 %v222
    %v317 = vpop.f32.mrb[0].mxu0
    %v318 = vadd.f32 %v244, %v317
    %v319 = vpop.f32.mrb[0].mxu0
    %320 = vdwg.mxu0
    %321 = vst [vmem:[#allocation14] sm:$0xff] %v313
    %322 = vst [vmem:[#allocation14 + $0x8] sm:$0xff] %v318
    %v323 = vld [vmem:[#allocation7] sm:$0xff]
    %v324 = vld [vmem:[#allocation7 + $0x8] sm:$0xff]
    %v325 = vld [vmem:[#allocation11] sm:$0xff]
    %v326 = vld [vmem:[#allocation11 + $0x8] sm:$0xff]
    %v327 = vld [vmem:[#allocation11 + $0x10] sm:$0xff]
    %v328 = vld [vmem:[#allocation11 + $0x18] sm:$0xff]
    %v329 = vld [vmem:[#allocation11 + $0x20] sm:$0xff]
    %v330 = vld [vmem:[#allocation11 + $0x28] sm:$0xff]
    %v331 = vld [vmem:[#allocation11 + $0x30] sm:$0xff]
    %v332 = vld [vmem:[#allocation11 + $0x38] sm:$0xff]
    %v333 = vld [vmem:[#allocation11 + $0x40] sm:$0xff]
    %v334 = vld [vmem:[#allocation11 + $0x48] sm:$0xff]
    %v335 = vld [vmem:[#allocation11 + $0x50] sm:$0xff]
    %v336 = vld [vmem:[#allocation11 + $0x58] sm:$0xff]
    %v337 = vld [vmem:[#allocation11 + $0x60] sm:$0xff]
    %v338 = vld [vmem:[#allocation11 + $0x68] sm:$0xff]
    %v339 = vld [vmem:[#allocation11 + $0x70] sm:$0xff]
    %v340 = vld [vmem:[#allocation11 + $0x78] sm:$0xff]
    %v341 = vld [vmem:[%s8] sm:$0x1]
    %v343 = vlaneseq
    %v344 = vshrl.u32 %v343, 7
    %v345 = vsub.s32 0, %v344
    %v346 = vrot.slane %v341, %v345
    %348 = vmatprep.subr.mxu0 0.0
    %349 = vmatpush1.msra.mxu0 %v325
    %350 = vmatprep.subr.mxu0 0.0
    %351 = vmatpush1.msra.mxu0 %v326
    %352 = vmatprep.subr.mxu0 0.0
    %353 = vmatpush1.msra.mxu0 %v327
    %354 = vmatprep.subr.mxu0 0.0
    %355 = vmatpush1.msra.mxu0 %v328
    %356 = vmatprep.subr.mxu0 0.0
    %357 = vmatpush1.msra.mxu0 %v329
    %358 = vmatprep.subr.mxu0 0.0
    %359 = vmatpush1.msra.mxu0 %v330
    %360 = vmatprep.subr.mxu0 0.0
    %361 = vmatpush1.msra.mxu0 %v331
    %362 = vmatprep.subr.mxu0 0.0
    %363 = vmatpush1.msra.mxu0 %v332
    %364 = vmatprep.subr.mxu0 0.0
    %365 = vmatpush1.msra.mxu0 %v333
    %366 = vmatprep.subr.mxu0 0.0
    %367 = vmatpush1.msra.mxu0 %v334
    %368 = vmatprep.subr.mxu0 0.0
    %369 = vmatpush1.msra.mxu0 %v335
    %370 = vmatprep.subr.mxu0 0.0
    %371 = vmatpush1.msra.mxu0 %v336
    %372 = vmatprep.subr.mxu0 0.0
    %373 = vmatpush1.msra.mxu0 %v337
    %374 = vmatprep.subr.mxu0 0.0
    %375 = vmatpush1.msra.mxu0 %v338
    %376 = vmatprep.subr.mxu0 0.0
    %377 = vmatpush1.msra.mxu0 %v339
    %378 = vmatprep.subr.mxu0 0.0
    %379 = vmatpush1.msra.mxu0 %v340
    %380 = vmatprep.subr.mxu0 0.0
    %381 = vmatpush1.msra.mxu0 0.0
    %382 = vmatprep.subr.mxu0 0.0
    %383 = vmatpush1.msra.mxu0 0.0
    %384 = vmatprep.subr.mxu0 0.0
    %385 = vmatpush1.msra.mxu0 0.0
    %386 = vmatprep.subr.mxu0 0.0
    %387 = vmatpush1.msra.mxu0 0.0
    %388 = vmatprep.subr.mxu0 0.0
    %389 = vmatpush1.msra.mxu0 0.0
    %390 = vmatprep.subr.mxu0 0.0
    %391 = vmatpush1.msra.mxu0 0.0
    %392 = vmatprep.subr.mxu0 0.0
    %393 = vmatpush1.msra.mxu0 0.0
    %394 = vmatprep.subr.mxu0 0.0
    %395 = vmatpush1.msra.mxu0 0.0
    %396 = vmatprep.subr.mxu0 0.0
    %397 = vmatpush1.msra.mxu0 0.0
    %398 = vmatprep.subr.mxu0 0.0
    %399 = vmatpush1.msra.mxu0 0.0
    %400 = vmatprep.subr.mxu0 0.0
    %401 = vmatpush1.msra.mxu0 0.0
    %402 = vmatprep.subr.mxu0 0.0
    %403 = vmatpush1.msra.mxu0 0.0
    %404 = vmatprep.subr.mxu0 0.0
    %405 = vmatpush1.msra.mxu0 0.0
    %406 = vmatprep.subr.mxu0 0.0
    %407 = vmatpush1.msra.mxu0 0.0
    %408 = vmatprep.subr.mxu0 0.0
    %409 = vmatpush1.msra.mxu0 0.0
    %410 = vmatprep.subr.mxu0 0.0
    %411 = vmatpush1.msra.mxu0 0.0
    %412 = vmatprep.mubr.f32.mxu0 0.0
    %413 = vmatmul.mubr.f32.gmra.mrb[0].mxu0 %v323
    %v414 = vpop.f32.mrb[0].mxu0
    %v415 = vadd.f32 %v346, %v414
    %v416 = vpop.f32.mrb[0].mxu0
    %417 = vmatprep.mubr.f32.mxu0 0.0
    %418 = vmatmul.mubr.f32.gmra.mrb[0].mxu0 %v324
    %v419 = vpop.f32.mrb[0].mxu0
    %v420 = vadd.f32 %v346, %v419
    %v421 = vpop.f32.mrb[0].mxu0
    %422 = vdwg.mxu0
    %423 = vst [vmem:[#allocation16] sm:$0xff] %v415
    %424 = vst [vmem:[#allocation16 + $0x8] sm:$0xff] %v420
    // Predicated region
    $region62: #{tpu_custom_call.1} parent=1 // pred_check
      _
    $region63: #{tpu_custom_call.1} parent=1 // pred_check_branch
      %426 = sbr.rel (0) target = $region65
    $region64: #{tpu_custom_call.1} parent=1 // pred_region
      %s428 = ssub.s32 256, 256
      %429 = vsyncadd [#allocation4], %s428
      %s430 = sshll.u32 [#allocation13], 4
      %s431 = int_to_ptr.vmem [resolvable:$true] %s430
      %436 = dma.vmem_to_hbm [thread:$0]  %s431, 256, %s9, [#allocation4], 128, 128, 8
    $region65: #{tpu_custom_call.1} parent=1 // pred_fallthru
      _
    // Predicated region
    $region66: #{tpu_custom_call.1} parent=1 // pred_check
      _
    $region67: #{tpu_custom_call.1} parent=1 // pred_check_branch
      %438 = sbr.rel (0) target = $region69
    $region68: #{tpu_custom_call.1} parent=1 // pred_region
      %s440 = ssub.s32 256, 256
      %441 = vsyncadd [#allocation15], %s440
      %s442 = sshll.u32 [#allocation14], 4
      %s443 = int_to_ptr.vmem [resolvable:$true] %s442
      %448 = dma.vmem_to_hbm [thread:$0]  %s443, 256, %s10, [#allocation15], 128, 128, 8
    $region69: #{tpu_custom_call.1} parent=1 // pred_fallthru
      _
    // Predicated region
    $region70: #{tpu_custom_call.1} parent=1 // pred_check
      _
    $region71: #{tpu_custom_call.1} parent=1 // pred_check_branch
      %450 = sbr.rel (0) target = $region73
    $region72: #{tpu_custom_call.1} parent=1 // pred_region
      %s452 = ssub.s32 256, 256
      %453 = vsyncadd [#allocation15], %s452
      %s454 = sshll.u32 [#allocation16], 4
      %s455 = int_to_ptr.vmem [resolvable:$true] %s454
      %460 = dma.vmem_to_hbm [thread:$0]  %s455, 256, %s11, [#allocation15], 128, 128, 8
    $region73: #{tpu_custom_call.1} parent=1 // pred_fallthru
      _
    // Predicated region
    $region74: #{tpu_custom_call.1} parent=1 // pred_check
      _
    $region75: #{tpu_custom_call.1} parent=1 // pred_check_branch
      %462 = sbr.rel (0) target = $region77
    $region76: #{tpu_custom_call.1} parent=1 // pred_region
      %463 = dma.done [#allocation4], 256
    $region77: #{tpu_custom_call.1} parent=1 // pred_fallthru
      _
    // Predicated region
    $region78: #{tpu_custom_call.1} parent=1 // pred_check
      _
    $region79: #{tpu_custom_call.1} parent=1 // pred_check_branch
      %465 = sbr.rel (0) target = $region81
    $region80: #{tpu_custom_call.1} parent=1 // pred_region
      %466 = dma.done [#allocation15], 256
    $region81: #{tpu_custom_call.1} parent=1 // pred_fallthru
      _
    // Predicated region
    $region82: #{tpu_custom_call.1} parent=1 // pred_check
      _
    $region83: #{tpu_custom_call.1} parent=1 // pred_check_branch
      %468 = sbr.rel (0) target = $region85
    $region84: #{tpu_custom_call.1} parent=1 // pred_region
      %469 = dma.done [#allocation15], 256
    $region85: #{tpu_custom_call.1} parent=1 // pred_fallthru
      _
    %470 = vsyncpa [#allocation3], 1
    %471 = vsyncpa [#allocation6], 1
    %472 = vsyncpa [#allocation9], 1
    %473 = vsyncpa [#allocation12], 1
    %474 = vsyncpa [#allocation4], 1
    %475 = vsyncpa [#allocation15], 1

</llo_original>
